<compile_context>
chip_gen: v7x
topology: tpu7x:2x2x1
jax: 0.10.0
libtpu: 0.0.40
codegen_flags: <defaults>
</compile_context>

<pallas_src>
import jax
import jax.numpy as jnp
from jax.experimental import pallas as pl
from jax.experimental.pallas import tpu as pltpu

_HIDDEN = 256
_HEAD = 128
_OUT_W = 8            # narrow lane-masked output slab; cols 0:2 = xl, col 2 = xt
_TILE_B = 4096        # max batch tile (balanced-down per call); ~20 MiB footprint
_VMEM_LIMIT = 48 << 20


def _ceil_div(a, b):
    return -(-a // b)


def _round_up(n, m):
    return ((n + m - 1) // m) * m


def _make_kernel(epilogue_bf16):
    """Whole forward pass for one batch tile; weights fully VMEM-resident."""
    bf16 = jnp.bfloat16

    def _lin_relu(h, w_ref, b_ref):
        y = jnp.dot(h, w_ref[...], preferred_element_type=jnp.float32)
        if epilogue_bf16:
            # bf16 VPU epilogue (v6e/v7x): cast once, bias-add + relu in bf16.
            return jnp.maximum(y.astype(bf16) + b_ref[...], 0)
        # f32 epilogue (v5-class chips): add/relu in f32, cast for the next MXU dot.
        return jnp.maximum(y + b_ref[...], 0.0).astype(bf16)

    def kernel(x_ref, w1_ref, b1_ref, w2_ref, b2_ref, w3_ref, b3_ref,
               w5_ref, b5_ref, w6_ref, b6_ref, out_ref):
        h = _lin_relu(x_ref[...], w1_ref, b1_ref)     # 9 -> 256 (f32 weight, tiny)
        h = _lin_relu(h, w2_ref, b2_ref)              # 256 -> 256 (bf16 MXU, f32 acc)
        h = _lin_relu(h, w3_ref, b3_ref)              # 256 -> 256
        h5 = _lin_relu(h, w5_ref, b5_ref)             # fused heads [l5l | l5t]: 256 -> 256
        # Block-diagonal fused l6l/l6t -> narrow (tb, 8) slab (xl in cols 0:2, xt in col 2).
        out_ref[...] = (jnp.dot(h5, w6_ref[...], preferred_element_type=jnp.float32)
                        + b6_ref[...]).astype(out_ref.dtype)

    return kernel


def prepare_params(params, *, epilogue_bf16):
    """One-time preprocessing: transpose, fuse heads, pad head-2 output, cast to bf16."""
    (w1, b1, w2, b2, w3, b3, w5l, b5l, w6l, b6l, w5t, b5t, w6t, b6t) = params
    bf16 = jnp.bfloat16
    bias_dtype = bf16 if epilogue_bf16 else jnp.float32

    # Fused head layer 5: columns [0:128] -> localization, [128:256] -> regression.
    w5 = jnp.concatenate([w5l.T, w5t.T], axis=1)            # (256, 256)
    b5 = jnp.concatenate([b5l, b5t])[None, :]                # (1, 256)

    # Fused head layer 6: block-diagonal into a narrow 8-lane output slab.
    w6 = jnp.zeros((2 * _HEAD, _OUT_W), jnp.float32)
    w6 = w6.at[:_HEAD, 0:2].set(w6l.T)                       # xl -> cols 0:2
    w6 = w6.at[_HEAD:, 2:3].set(w6t.T)                       # xt -> col 2
    b6 = jnp.zeros((1, _OUT_W), jnp.float32)
    b6 = b6.at[0, 0:2].set(b6l).at[0, 2:3].set(b6t)

    return (w1.T, b1[None, :].astype(bias_dtype),
            w2.T.astype(bf16), b2[None, :].astype(bias_dtype),
            w3.T.astype(bf16), b3[None, :].astype(bias_dtype),
            w5.astype(bf16), b5.astype(bias_dtype),
            w6.astype(bf16), b6)


def _build_forward(dim_sem, epilogue_bf16, tile_b=_TILE_B):
    kernel = _make_kernel(epilogue_bf16)

    @jax.jit
    def forward(x, prepared):
        B = x.shape[0]
        (w1t, b1, w2t, b2, w3t, b3, w5, b5, w6, b6) = prepared

        # Balanced batch tiling: fewest grid steps, last tile never mostly padding.
        n_tiles = max(1, _ceil_div(B, tile_b))
        tb = _round_up(_ceil_div(B, n_tiles), 8)     # sublane-aligned tile
        Bp = n_tiles * tb
        xp = x if Bp == B else jnp.pad(x, ((0, Bp - B), (0, 0)))

        def _resident(a):
            # Full-array block + constant index_map -> stays VMEM-resident across tiles.
            return pl.BlockSpec(a.shape, lambda i: (0, 0))

        out = pl.pallas_call(
            kernel,
            out_shape=jax.ShapeDtypeStruct((Bp, _OUT_W), jnp.float32),
            grid=(n_tiles,),
            in_specs=[
                pl.BlockSpec((tb, xp.shape[1]), lambda i: (i, 0)),
                _resident(w1t), _resident(b1),
                _resident(w2t), _resident(b2),
                _resident(w3t), _resident(b3),
                _resident(w5), _resident(b5),
                _resident(w6), _resident(b6),
            ],
            out_specs=pl.BlockSpec((tb, _OUT_W), lambda i: (i, 0)),
            compiler_params=pltpu.CompilerParams(
                dimension_semantics=(dim_sem,),
                vmem_limit_bytes=_VMEM_LIMIT),
        )(xp, w1t, b1, w2t, b2, w3t, b3, w5, b5, w6, b6)

        # Tiny slices off the narrow slab -> (xl, xt) exactly as the PyTorch module.
        return out[:B, :2], out[:B, 2:3]

    return forward


def _init_params(key):
    """Deterministic synthetic parameters matching the PyTorch Baseline's shapes."""
    ks = iter(jax.random.split(key, 32))

    def lin(out_f, in_f):
        w = jax.random.normal(next(ks), (out_f, in_f), jnp.float32) * 0.05
        b = jax.random.normal(next(ks), (out_f,), jnp.float32) * 0.05
        return w, b

    w1, b1 = lin(256, 9)
    w2, b2 = lin(256, 256)
    w3, b3 = lin(256, 256)
    w5l, b5l = lin(128, 256)
    w6l, b6l = lin(2, 128)
    w5t, b5t = lin(128, 256)
    w6t, b6t = lin(1, 128)
    return (w1, b1, w2, b2, w3, b3, w5l, b5l, w6l, b6l, w5t, b5t, w6t, b6t)


def _reference_forward(x, params):
    """Pure-JAX f32 reference matching the PyTorch module exactly."""
    (w1, b1, w2, b2, w3, b3, w5l, b5l, w6l, b6l, w5t, b5t, w6t, b6t) = params
    h = jnp.maximum(x @ w1.T + b1, 0.0)
    h = jnp.maximum(h @ w2.T + b2, 0.0)
    h = jnp.maximum(h @ w3.T + b3, 0.0)
    xl = jnp.maximum(h @ w5l.T + b5l, 0.0) @ w6l.T + b6l
    xt = jnp.maximum(h @ w5t.T + b5t, 0.0) @ w6t.T + b6t
    return xl, xt


if __name__ == "__main__":
    key = jax.random.PRNGKey(0)
    k_x, k_p = jax.random.split(key)

    B = 10                                           # also exercises batch padding (10 -> 16)
    x = jax.random.normal(k_x, (B, 9), jnp.float32)
    params = _init_params(k_p)

    kind = jax.devices()[0].device_kind.lower()
    epilogue_bf16 = ("v6" in kind) or ("v7" in kind)  # v5-class: keep f32 epilogue (no bf16 VPU)
    prepared = prepare_params(params, epilogue_bf16=epilogue_bf16)   # once, off the hot path

    # v7x: try sharding batch tiles across both TensorCores; always fall back to "parallel".
    dim_sems = ([pltpu.CORE_PARALLEL] if "v7" in kind else []) + ["parallel"]
    out_l = out_t = None
    for idx, ds in enumerate(dim_sems):
        try:
            forward = _build_forward(ds, epilogue_bf16)
            out_l, out_t = jax.block_until_ready(forward(x, prepared))
            break
        except Exception:
            if idx == len(dim_sems) - 1:
                raise

    ref_l, ref_t = _reference_forward(x, params)
    assert out_l.shape == (B, 2) and out_t.shape == (B, 1)
    # bf16 matmul operands (and bf16 epilogues on v6e/v7x) with f32 accumulation.
    assert jnp.allclose(out_l, ref_l, atol=2e-2, rtol=2e-2), float(jnp.max(jnp.abs(out_l - ref_l)))
    assert jnp.allclose(out_t, ref_t, atol=2e-2, rtol=2e-2), float(jnp.max(jnp.abs(out_t - ref_t)))

    print("KERNEL_OK")
</pallas_src>

<mosaic_0001>
module attributes {stable_mosaic.version = 11 : i64} {
  func.func @kernel(%arg0: i32, %arg1: memref<16x9xf32, #tpu.memory_space<vmem>>, %arg2: memref<9x256xf32, #tpu.memory_space<vmem>>, %arg3: memref<1x256xf32, #tpu.memory_space<vmem>>, %arg4: memref<256x256xbf16, #tpu.memory_space<vmem>>, %arg5: memref<1x256xf32, #tpu.memory_space<vmem>>, %arg6: memref<256x256xbf16, #tpu.memory_space<vmem>>, %arg7: memref<1x256xf32, #tpu.memory_space<vmem>>, %arg8: memref<256x256xbf16, #tpu.memory_space<vmem>>, %arg9: memref<1x256xf32, #tpu.memory_space<vmem>>, %arg10: memref<256x8xbf16, #tpu.memory_space<vmem>>, %arg11: memref<1x8xf32, #tpu.memory_space<vmem>>, %arg12: memref<16x8xf32, #tpu.memory_space<vmem>>) attributes {dimension_semantics = [#tpu.dimension_semantics<parallel>], iteration_bounds = array<i64: 1>, scalar_prefetch = 0 : i64, scratch_operands = 0 : i64, tpu.core_type = #tpu.core_type<tc>, window_params = [{transform_indices = @transform_0, window_bounds = array<i64: 16, 9>}, {pipeline_mode = #tpu.pipeline_mode<synchronous>, transform_indices = @transform_1, window_bounds = array<i64: 9, 256>}, {pipeline_mode = #tpu.pipeline_mode<synchronous>, transform_indices = @transform_2, window_bounds = array<i64: 1, 256>}, {pipeline_mode = #tpu.pipeline_mode<synchronous>, transform_indices = @transform_3, window_bounds = array<i64: 256, 256>}, {pipeline_mode = #tpu.pipeline_mode<synchronous>, transform_indices = @transform_4, window_bounds = array<i64: 1, 256>}, {pipeline_mode = #tpu.pipeline_mode<synchronous>, transform_indices = @transform_5, window_bounds = array<i64: 256, 256>}, {pipeline_mode = #tpu.pipeline_mode<synchronous>, transform_indices = @transform_6, window_bounds = array<i64: 1, 256>}, {pipeline_mode = #tpu.pipeline_mode<synchronous>, transform_indices = @transform_7, window_bounds = array<i64: 256, 256>}, {pipeline_mode = #tpu.pipeline_mode<synchronous>, transform_indices = @transform_8, window_bounds = array<i64: 1, 256>}, {pipeline_mode = #tpu.pipeline_mode<synchronous>, transform_indices = @transform_9, window_bounds = array<i64: 256, 8>}, {pipeline_mode = #tpu.pipeline_mode<synchronous>, transform_indices = @transform_10, window_bounds = array<i64: 1, 8>}, {transform_indices = @transform_11, window_bounds = array<i64: 16, 8>}]} {
    %c0 = arith.constant 0 : index
    %c0_0 = arith.constant 0 : index
    %0 = vector.load %arg1[%c0, %c0_0] : memref<16x9xf32, #tpu.memory_space<vmem>>, vector<16x9xf32>
    %c0_1 = arith.constant 0 : index
    %c0_2 = arith.constant 0 : index
    %1 = vector.load %arg2[%c0_1, %c0_2] : memref<9x256xf32, #tpu.memory_space<vmem>>, vector<9x256xf32>
    %cst = arith.constant dense<0.000000e+00> : vector<16x256xf32>
    %2 = tpu.matmul %0, %1, %cst {dimension_numbers = #tpu.dot_dimension_numbers<[1], [0], [0], [1], [0, 0, 1, 1], [], []>} : vector<16x9xf32>, vector<9x256xf32>, vector<16x256xf32> -> vector<16x256xf32>
    %c0_3 = arith.constant 0 : index
    %c0_4 = arith.constant 0 : index
    %3 = vector.load %arg3[%c0_3, %c0_4] : memref<1x256xf32, #tpu.memory_space<vmem>>, vector<1x256xf32>
    %4 = vector.broadcast %3 : vector<1x256xf32> to vector<16x256xf32>
    %5 = arith.addf %2, %4 : vector<16x256xf32>
    %cst_5 = arith.constant 0.000000e+00 : f32
    %6 = vector.broadcast %cst_5 : f32 to vector<16x256xf32>
    %7 = arith.maximumf %5, %6 : vector<16x256xf32>
    %8 = arith.truncf %7 : vector<16x256xf32> to vector<16x256xbf16>
    %c0_6 = arith.constant 0 : index
    %c0_7 = arith.constant 0 : index
    %9 = vector.load %arg4[%c0_6, %c0_7] : memref<256x256xbf16, #tpu.memory_space<vmem>>, vector<256x256xbf16>
    %cst_8 = arith.constant dense<0.000000e+00> : vector<16x256xf32>
    %10 = tpu.matmul %8, %9, %cst_8 {dimension_numbers = #tpu.dot_dimension_numbers<[1], [0], [0], [1], [0, 0, 1, 1], [], []>} : vector<16x256xbf16>, vector<256x256xbf16>, vector<16x256xf32> -> vector<16x256xf32>
    %c0_9 = arith.constant 0 : index
    %c0_10 = arith.constant 0 : index
    %11 = vector.load %arg5[%c0_9, %c0_10] : memref<1x256xf32, #tpu.memory_space<vmem>>, vector<1x256xf32>
    %12 = vector.broadcast %11 : vector<1x256xf32> to vector<16x256xf32>
    %13 = arith.addf %10, %12 : vector<16x256xf32>
    %cst_11 = arith.constant 0.000000e+00 : f32
    %14 = vector.broadcast %cst_11 : f32 to vector<16x256xf32>
    %15 = arith.maximumf %13, %14 : vector<16x256xf32>
    %16 = arith.truncf %15 : vector<16x256xf32> to vector<16x256xbf16>
    %c0_12 = arith.constant 0 : index
    %c0_13 = arith.constant 0 : index
    %17 = vector.load %arg6[%c0_12, %c0_13] : memref<256x256xbf16, #tpu.memory_space<vmem>>, vector<256x256xbf16>
    %cst_14 = arith.constant dense<0.000000e+00> : vector<16x256xf32>
    %18 = tpu.matmul %16, %17, %cst_14 {dimension_numbers = #tpu.dot_dimension_numbers<[1], [0], [0], [1], [0, 0, 1, 1], [], []>} : vector<16x256xbf16>, vector<256x256xbf16>, vector<16x256xf32> -> vector<16x256xf32>
    %c0_15 = arith.constant 0 : index
    %c0_16 = arith.constant 0 : index
    %19 = vector.load %arg7[%c0_15, %c0_16] : memref<1x256xf32, #tpu.memory_space<vmem>>, vector<1x256xf32>
    %20 = vector.broadcast %19 : vector<1x256xf32> to vector<16x256xf32>
    %21 = arith.addf %18, %20 : vector<16x256xf32>
    %cst_17 = arith.constant 0.000000e+00 : f32
    %22 = vector.broadcast %cst_17 : f32 to vector<16x256xf32>
    %23 = arith.maximumf %21, %22 : vector<16x256xf32>
    %24 = arith.truncf %23 : vector<16x256xf32> to vector<16x256xbf16>
    %c0_18 = arith.constant 0 : index
    %c0_19 = arith.constant 0 : index
    %25 = vector.load %arg8[%c0_18, %c0_19] : memref<256x256xbf16, #tpu.memory_space<vmem>>, vector<256x256xbf16>
    %cst_20 = arith.constant dense<0.000000e+00> : vector<16x256xf32>
    %26 = tpu.matmul %24, %25, %cst_20 {dimension_numbers = #tpu.dot_dimension_numbers<[1], [0], [0], [1], [0, 0, 1, 1], [], []>} : vector<16x256xbf16>, vector<256x256xbf16>, vector<16x256xf32> -> vector<16x256xf32>
    %c0_21 = arith.constant 0 : index
    %c0_22 = arith.constant 0 : index
    %27 = vector.load %arg9[%c0_21, %c0_22] : memref<1x256xf32, #tpu.memory_space<vmem>>, vector<1x256xf32>
    %28 = vector.broadcast %27 : vector<1x256xf32> to vector<16x256xf32>
    %29 = arith.addf %26, %28 : vector<16x256xf32>
    %cst_23 = arith.constant 0.000000e+00 : f32
    %30 = vector.broadcast %cst_23 : f32 to vector<16x256xf32>
    %31 = arith.maximumf %29, %30 : vector<16x256xf32>
    %32 = arith.truncf %31 : vector<16x256xf32> to vector<16x256xbf16>
    %c0_24 = arith.constant 0 : index
    %c0_25 = arith.constant 0 : index
    %33 = vector.load %arg10[%c0_24, %c0_25] : memref<256x8xbf16, #tpu.memory_space<vmem>>, vector<256x8xbf16>
    %cst_26 = arith.constant dense<0.000000e+00> : vector<16x8xf32>
    %34 = tpu.matmul %32, %33, %cst_26 {dimension_numbers = #tpu.dot_dimension_numbers<[1], [0], [0], [1], [0, 0, 1, 1], [], []>} : vector<16x256xbf16>, vector<256x8xbf16>, vector<16x8xf32> -> vector<16x8xf32>
    %c0_27 = arith.constant 0 : index
    %c0_28 = arith.constant 0 : index
    %35 = vector.load %arg11[%c0_27, %c0_28] : memref<1x8xf32, #tpu.memory_space<vmem>>, vector<1x8xf32>
    %36 = vector.broadcast %35 : vector<1x8xf32> to vector<16x8xf32>
    %37 = arith.addf %34, %36 : vector<16x8xf32>
    %c0_29 = arith.constant 0 : index
    %c0_30 = arith.constant 0 : index
    %38 = vector.load %arg12[%c0_29, %c0_30] : memref<16x8xf32, #tpu.memory_space<vmem>>, vector<16x8xf32>
    tpu.vector_store %arg12[%c0_29, %c0_30], %37 {strides = array<i32>} : memref<16x8xf32, #tpu.memory_space<vmem>>, vector<16x8xf32>,
    return
  }
  func.func @transform_0(%arg0: i32) -> (i32, i32) {
    %c0_i32 = arith.constant 0 : i32
    %c0_i32_0 = arith.constant 0 : i32
    return %arg0, %c0_i32 : i32, i32
  }
  func.func @transform_1(%arg0: i32) -> (i32, i32) {
    %c0_i32 = arith.constant 0 : i32
    %c0_i32_0 = arith.constant 0 : i32
    %c0_i32_1 = arith.constant 0 : i32
    return %c0_i32, %c0_i32_0 : i32, i32
  }
  func.func @transform_2(%arg0: i32) -> (i32, i32) {
    %c0_i32 = arith.constant 0 : i32
    %c0_i32_0 = arith.constant 0 : i32
    %c0_i32_1 = arith.constant 0 : i32
    return %c0_i32, %c0_i32_0 : i32, i32
  }
  func.func @transform_3(%arg0: i32) -> (i32, i32) {
    %c0_i32 = arith.constant 0 : i32
    %c0_i32_0 = arith.constant 0 : i32
    %c0_i32_1 = arith.constant 0 : i32
    return %c0_i32, %c0_i32_0 : i32, i32
  }
  func.func @transform_4(%arg0: i32) -> (i32, i32) {
    %c0_i32 = arith.constant 0 : i32
    %c0_i32_0 = arith.constant 0 : i32
    %c0_i32_1 = arith.constant 0 : i32
    return %c0_i32, %c0_i32_0 : i32, i32
  }
  func.func @transform_5(%arg0: i32) -> (i32, i32) {
    %c0_i32 = arith.constant 0 : i32
    %c0_i32_0 = arith.constant 0 : i32
    %c0_i32_1 = arith.constant 0 : i32
    return %c0_i32, %c0_i32_0 : i32, i32
  }
  func.func @transform_6(%arg0: i32) -> (i32, i32) {
    %c0_i32 = arith.constant 0 : i32
    %c0_i32_0 = arith.constant 0 : i32
    %c0_i32_1 = arith.constant 0 : i32
    return %c0_i32, %c0_i32_0 : i32, i32
  }
  func.func @transform_7(%arg0: i32) -> (i32, i32) {
    %c0_i32 = arith.constant 0 : i32
    %c0_i32_0 = arith.constant 0 : i32
    %c0_i32_1 = arith.constant 0 : i32
    return %c0_i32, %c0_i32_0 : i32, i32
  }
  func.func @transform_8(%arg0: i32) -> (i32, i32) {
    %c0_i32 = arith.constant 0 : i32
    %c0_i32_0 = arith.constant 0 : i32
    %c0_i32_1 = arith.constant 0 : i32
    return %c0_i32, %c0_i32_0 : i32, i32
  }
  func.func @transform_9(%arg0: i32) -> (i32, i32) {
    %c0_i32 = arith.constant 0 : i32
    %c0_i32_0 = arith.constant 0 : i32
    %c0_i32_1 = arith.constant 0 : i32
    return %c0_i32, %c0_i32_0 : i32, i32
  }
  func.func @transform_10(%arg0: i32) -> (i32, i32) {
    %c0_i32 = arith.constant 0 : i32
    %c0_i32_0 = arith.constant 0 : i32
    %c0_i32_1 = arith.constant 0 : i32
    return %c0_i32, %c0_i32_0 : i32, i32
  }
  func.func @transform_11(%arg0: i32) -> (i32, i32) {
    %c0_i32 = arith.constant 0 : i32
    %c0_i32_0 = arith.constant 0 : i32
    return %arg0, %c0_i32 : i32, i32
  }
}

</mosaic_0001>

<llo_original>
// kernel: forward.1
$region0: #{forward.1}
  #allocation0 [shape = 'u32[]', space=smem, size = 0x4, offset = 0x4, fixed_abs, tag = 'smem constant byte address 0x4 - core index']
  #allocation1 [shape = 'u32[144,128]{1,0:T(1,128)}', space=vmem, size = 0x12000, scoped, tag = 'internal scratch']
  %s0 = inlined_call_operand.vmem [shape: f32[16,9], index: 0, kind: input, shape index: {}]
  %s1 = inlined_call_operand.vmem [shape: f32[9,256], index: 1, kind: input, shape index: {}]
  %s2 = inlined_call_operand.vmem [shape: f32[1,256], index: 2, kind: input, shape index: {}]
  %s3 = inlined_call_operand.hbm [shape: bf16[256,256], index: 3, kind: input, shape index: {}]
  %s4 = inlined_call_operand.vmem [shape: f32[1,256], index: 4, kind: input, shape index: {}]
  %s5 = inlined_call_operand.hbm [shape: bf16[256,256], index: 5, kind: input, shape index: {}]
  %s6 = inlined_call_operand.vmem [shape: f32[1,256], index: 6, kind: input, shape index: {}]
  %s7 = inlined_call_operand.hbm [shape: bf16[256,256], index: 7, kind: input, shape index: {}]
  %s8 = inlined_call_operand.vmem [shape: f32[1,256], index: 8, kind: input, shape index: {}]
  %s9 = inlined_call_operand.vmem [shape: bf16[256,8], index: 9, kind: input, shape index: {}]
  %s10 = inlined_call_operand.vmem [shape: f32[1,8], index: 10, kind: input, shape index: {}]
  %s11 = inlined_call_operand.vmem [shape: f32[16,8], index: 11, kind: output, shape index: {}]
  %s12 = sld [smem:[#allocation0]]
  $region66: #{forward.1} parent=0
    _
  %s14 = ssub.s32 1, %s12
  %s15 = scalar_select 0, %s14, %s12
  $region1: #{forward.1} parent=0
    #allocation2 [shape = 'u8[131072]{0}', space=vmem, size = 0x20000, scoped, tag = 'input window, operand 3, single buffered']
    #allocation3 [shape = 's32[1]{0}', space=sflag, size = 0x4, scoped, tag = 'scoped memory for forward.1']
    #allocation4 [shape = 'u8[131072]{0}', space=vmem, size = 0x20000, scoped, tag = 'input window, operand 5, single buffered']
    #allocation5 [shape = 's32[1]{0}', space=sflag, size = 0x4, scoped, tag = 'scoped memory for forward.1']
    #allocation6 [shape = 'u8[131072]{0}', space=vmem, size = 0x20000, scoped, tag = 'input window, operand 7, single buffered']
    %16 = vsyncpa [#allocation3], 0
    %17 = vsyncpa [#allocation5], 0
    // Predicated region
    $region2: #{forward.1} parent=1 // pred_check
      _
    $region3: #{forward.1} parent=1 // pred_check_branch
      %19 = sbr.rel (0) target = $region5
    $region4: #{forward.1} parent=1 // pred_region
      _
    $region5: #{forward.1} parent=1 // pred_fallthru
      _
    // Predicated region
    $region6: #{forward.1} parent=1 // pred_check
      _
    $region7: #{forward.1} parent=1 // pred_check_branch
      %21 = sbr.rel (0) target = $region9
    $region8: #{forward.1} parent=1 // pred_region
      _
    $region9: #{forward.1} parent=1 // pred_fallthru
      _
    // Predicated region
    $region10: #{forward.1} parent=1 // pred_check
      _
    $region11: #{forward.1} parent=1 // pred_check_branch
      %23 = sbr.rel (0) target = $region13
    $region12: #{forward.1} parent=1 // pred_region
      _
    $region13: #{forward.1} parent=1 // pred_fallthru
      _
    // Predicated region
    $region14: #{forward.1} parent=1 // pred_check
      _
    $region15: #{forward.1} parent=1 // pred_check_branch
      %25 = sbr.rel (0) target = $region17
    $region16: #{forward.1} parent=1 // pred_region
      %s27 = ssub.s32 4096, 4096
      %28 = vsyncadd [#allocation3], %s27
      %s29 = sshll.u32 [#allocation2], 4
      %s30 = int_to_ptr.vmem [resolvable:$true] %s29
      %35 = dma.hbm_to_vmem [thread:$0]  %s3, 4096, %s30, [#allocation3], 128, 128, 8
    $region17: #{forward.1} parent=1 // pred_fallthru
      _
    // Predicated region
    $region18: #{forward.1} parent=1 // pred_check
      _
    $region19: #{forward.1} parent=1 // pred_check_branch
      %37 = sbr.rel (0) target = $region21
    $region20: #{forward.1} parent=1 // pred_region
      _
    $region21: #{forward.1} parent=1 // pred_fallthru
      _
    // Predicated region
    $region22: #{forward.1} parent=1 // pred_check
      _
    $region23: #{forward.1} parent=1 // pred_check_branch
      %39 = sbr.rel (0) target = $region25
    $region24: #{forward.1} parent=1 // pred_region
      %s41 = ssub.s32 4096, 4096
      %42 = vsyncadd [#allocation5], %s41
      %s43 = sshll.u32 [#allocation4], 4
      %s44 = int_to_ptr.vmem [resolvable:$true] %s43
      %49 = dma.hbm_to_vmem [thread:$0]  %s5, 4096, %s44, [#allocation5], 128, 128, 8
    $region25: #{forward.1} parent=1 // pred_fallthru
      _
    // Predicated region
    $region26: #{forward.1} parent=1 // pred_check
      _
    $region27: #{forward.1} parent=1 // pred_check_branch
      %51 = sbr.rel (0) target = $region29
    $region28: #{forward.1} parent=1 // pred_region
      _
    $region29: #{forward.1} parent=1 // pred_fallthru
      _
    // Predicated region
    $region30: #{forward.1} parent=1 // pred_check
      _
    $region31: #{forward.1} parent=1 // pred_check_branch
      %53 = sbr.rel (0) target = $region33
    $region32: #{forward.1} parent=1 // pred_region
      %s55 = ssub.s32 4096, 4096
      %56 = vsyncadd [#allocation5], %s55
      %s57 = sshll.u32 [#allocation6], 4
      %s58 = int_to_ptr.vmem [resolvable:$true] %s57
      %63 = dma.hbm_to_vmem [thread:$0]  %s7, 4096, %s58, [#allocation5], 128, 128, 8
    $region33: #{forward.1} parent=1 // pred_fallthru
      _
    // Predicated region
    $region34: #{forward.1} parent=1 // pred_check
      _
    $region35: #{forward.1} parent=1 // pred_check_branch
      %65 = sbr.rel (0) target = $region37
    $region36: #{forward.1} parent=1 // pred_region
      _
    $region37: #{forward.1} parent=1 // pred_fallthru
      _
    // Predicated region
    $region38: #{forward.1} parent=1 // pred_check
      _
    $region39: #{forward.1} parent=1 // pred_check_branch
      %67 = sbr.rel (0) target = $region41
    $region40: #{forward.1} parent=1 // pred_region
      _
    $region41: #{forward.1} parent=1 // pred_fallthru
      _
    // Predicated region
    $region42: #{forward.1} parent=1 // pred_check
      _
    $region43: #{forward.1} parent=1 // pred_check_branch
      %69 = sbr.rel (0) target = $region45
    $region44: #{forward.1} parent=1 // pred_region
      _
    $region45: #{forward.1} parent=1 // pred_fallthru
      _
    // Predicated region
    $region46: #{forward.1} parent=1 // pred_check
      _
    $region47: #{forward.1} parent=1 // pred_check_branch
      %71 = sbr.rel (0) target = $region49
    $region48: #{forward.1} parent=1 // pred_region
      %72 = dma.done [#allocation3], 4096
    $region49: #{forward.1} parent=1 // pred_fallthru
      _
    // Predicated region
    $region50: #{forward.1} parent=1 // pred_check
      _
    $region51: #{forward.1} parent=1 // pred_check_branch
      %74 = sbr.rel (0) target = $region53
    $region52: #{forward.1} parent=1 // pred_region
      %75 = dma.done [#allocation5], 4096
    $region53: #{forward.1} parent=1 // pred_fallthru
      _
    // Predicated region
    $region54: #{forward.1} parent=1 // pred_check
      _
    $region55: #{forward.1} parent=1 // pred_check_branch
      %77 = sbr.rel (0) target = $region57
    $region56: #{forward.1} parent=1 // pred_region
      %78 = dma.done [#allocation5], 4096
    $region57: #{forward.1} parent=1 // pred_fallthru
      _
    %v80 = vld [vmem:[%s0] sm:$0xff]
    %v81 = vld [vmem:[%s0 + $0x8] sm:$0xff]
    %v82 = vld [vmem:[%s1] sm:$0xff]
    %v83 = vld [vmem:[%s1 + $0x8] sm:$0xff]
    %v84 = vld [vmem:[%s1 + $0x10] sm:$0x1]
    %v85 = vld [vmem:[%s1 + $0x18] sm:$0x1]
    %v86 = vld [vmem:[%s2] sm:$0x3]
    %v88 = vlaneseq
    %v89 = vshrl.u32 %v88, 7
    %v90 = vsub.s32 0, %v89
    %v91 = vrot.slane %v86, %v90
    %v92 = vlaneseq
    %v93 = vshrl.u32 %v92, 7
    %v94 = vsub.s32 1, %v93
    %v95 = vrot.slane %v86, %v94
    %vm98 = vcmask 72704
    %v100 = vsel %vm98, %v80, 0
    %v103 = vsel %vm98, %v81, 0
    %vm105 = vcmask 1040384
    %v107 = vsel %vm105, %v84, 0
    %v110 = vsel %vm105, %v85, 0
    %112 = vmatprep.subr.mxu0 %v83
    %113 = vmatpush1.msra.mxu0 %v82
    %114 = vmatprep.subr.mxu0 %v110
    %115 = vmatpush1.msra.mxu0 %v107
    %116 = vmatprep.subr.mxu0 0.0
    %117 = vmatpush1.msra.mxu0 0.0
    %118 = vmatprep.subr.mxu0 0.0
    %119 = vmatpush1.msra.mxu0 0.0
    %120 = vmatprep.subr.mxu0 0.0
    %121 = vmatpush1.msra.mxu0 0.0
    %122 = vmatprep.subr.mxu0 0.0
    %123 = vmatpush1.msra.mxu0 0.0
    %124 = vmatprep.subr.mxu0 0.0
    %125 = vmatpush1.msra.mxu0 0.0
    %126 = vmatprep.subr.mxu0 0.0
    %127 = vmatpush1.msra.mxu0 0.0
    %128 = vmatprep.subr.mxu0 0.0
    %129 = vmatpush1.msra.mxu0 0.0
    %130 = vmatprep.subr.mxu0 0.0
    %131 = vmatpush1.msra.mxu0 0.0
    %132 = vmatprep.subr.mxu0 0.0
    %133 = vmatpush1.msra.mxu0 0.0
    %134 = vmatprep.subr.mxu0 0.0
    %135 = vmatpush1.msra.mxu0 0.0
    %136 = vmatprep.subr.mxu0 0.0
    %137 = vmatpush1.msra.mxu0 0.0
    %138 = vmatprep.subr.mxu0 0.0
    %139 = vmatpush1.msra.mxu0 0.0
    %140 = vmatprep.subr.mxu0 0.0
    %141 = vmatpush1.msra.mxu0 0.0
    %142 = vmatprep.subr.mxu0 0.0
    %143 = vmatpush1.msra.mxu0 0.0
    %144 = vmatprep.subr.mxu0 0.0
    %145 = vmatpush1.msra.mxu0 0.0
    %146 = vmatprep.subr.mxu0 0.0
    %147 = vmatpush1.msra.mxu0 0.0
    %148 = vmatprep.subr.mxu0 0.0
    %149 = vmatpush1.msra.mxu0 0.0
    %150 = vmatprep.subr.mxu0 0.0
    %151 = vmatpush1.msra.mxu0 0.0
    %152 = vmatprep.subr.mxu0 0.0
    %153 = vmatpush1.msra.mxu0 0.0
    %154 = vmatprep.subr.mxu0 0.0
    %155 = vmatpush1.msra.mxu0 0.0
    %156 = vmatprep.subr.mxu0 0.0
    %157 = vmatpush1.msra.mxu0 0.0
    %158 = vmatprep.subr.mxu0 0.0
    %159 = vmatpush1.msra.mxu0 0.0
    %160 = vmatprep.subr.mxu0 0.0
    %161 = vmatpush1.msra.mxu0 0.0
    %162 = vmatprep.subr.mxu0 0.0
    %163 = vmatpush1.msra.mxu0 0.0
    %164 = vmatprep.subr.mxu0 0.0
    %165 = vmatpush1.msra.mxu0 0.0
    %166 = vmatprep.subr.mxu0 0.0
    %167 = vmatpush1.msra.mxu0 0.0
    %168 = vmatprep.subr.mxu0 0.0
    %169 = vmatpush1.msra.mxu0 0.0
    %170 = vmatprep.subr.mxu0 0.0
    %171 = vmatpush1.msra.mxu0 0.0
    %172 = vmatprep.subr.mxu0 0.0
    %173 = vmatpush1.msra.mxu0 0.0
    %174 = vmatprep.subr.mxu0 0.0
    %175 = vmatpush1.msra.mxu0 0.0
    %176 = vmatprep.mubr.f32.mxu0 0.0
    %177 = vmatmul.mubr.f32.gmra.mrb[0].mxu0 %v100
    %v178 = vpop.f32.mrb[0].mxu0
    %v179 = vadd.f32 %v91, %v178
    %v180 = vpop.f32.mrb[0].mxu0
    %v181 = vadd.f32 %v95, %v180
    %182 = vmatprep.mubr.f32.mxu0 0.0
    %183 = vmatmul.mubr.f32.gmra.mrb[0].mxu0 %v103
    %v184 = vpop.f32.mrb[0].mxu0
    %v185 = vadd.f32 %v91, %v184
    %v186 = vpop.f32.mrb[0].mxu0
    %v187 = vadd.f32 %v95, %v186
    %188 = vdwg.mxu0
    %v189 = vmax.f32 %v179, 0.0
    %v190 = vmax.f32 %v181, 0.0
    %v191 = vmax.f32 %v185, 0.0
    %v192 = vmax.f32 %v187, 0.0
    %v193 = vpack.c.bf16 %v191, %v189
    %v194 = vpack.c.bf16 %v192, %v190
    %v195 = vld [vmem:[#allocation2] sm:$0xff]
    %v196 = vld [vmem:[#allocation2 + $0x8] sm:$0xff]
    %v197 = vld [vmem:[#allocation2 + $0x10] sm:$0xff]
    %v198 = vld [vmem:[#allocation2 + $0x18] sm:$0xff]
    %v199 = vld [vmem:[#allocation2 + $0x20] sm:$0xff]
    %v200 = vld [vmem:[#allocation2 + $0x28] sm:$0xff]
    %v201 = vld [vmem:[#allocation2 + $0x30] sm:$0xff]
    %v202 = vld [vmem:[#allocation2 + $0x38] sm:$0xff]
    %v203 = vld [vmem:[#allocation2 + $0x40] sm:$0xff]
    %v204 = vld [vmem:[#allocation2 + $0x48] sm:$0xff]
    %v205 = vld [vmem:[#allocation2 + $0x50] sm:$0xff]
    %v206 = vld [vmem:[#allocation2 + $0x58] sm:$0xff]
    %v207 = vld [vmem:[#allocation2 + $0x60] sm:$0xff]
    %v208 = vld [vmem:[#allocation2 + $0x68] sm:$0xff]
    %v209 = vld [vmem:[#allocation2 + $0x70] sm:$0xff]
    %v210 = vld [vmem:[#allocation2 + $0x78] sm:$0xff]
    %v211 = vld [vmem:[#allocation2 + $0x80] sm:$0xff]
    %v212 = vld [vmem:[#allocation2 + $0x88] sm:$0xff]
    %v213 = vld [vmem:[#allocation2 + $0x90] sm:$0xff]
    %v214 = vld [vmem:[#allocation2 + $0x98] sm:$0xff]
    %v215 = vld [vmem:[#allocation2 + $0xa0] sm:$0xff]
    %v216 = vld [vmem:[#allocation2 + $0xa8] sm:$0xff]
    %v217 = vld [vmem:[#allocation2 + $0xb0] sm:$0xff]
    %v218 = vld [vmem:[#allocation2 + $0xb8] sm:$0xff]
    %v219 = vld [vmem:[#allocation2 + $0xc0] sm:$0xff]
    %v220 = vld [vmem:[#allocation2 + $0xc8] sm:$0xff]
    %v221 = vld [vmem:[#allocation2 + $0xd0] sm:$0xff]
    %v222 = vld [vmem:[#allocation2 + $0xd8] sm:$0xff]
    %v223 = vld [vmem:[#allocation2 + $0xe0] sm:$0xff]
    %v224 = vld [vmem:[#allocation2 + $0xe8] sm:$0xff]
    %v225 = vld [vmem:[#allocation2 + $0xf0] sm:$0xff]
    %v226 = vld [vmem:[#allocation2 + $0xf8] sm:$0xff]
    %v227 = vld [vmem:[%s4] sm:$0x3]
    %v229 = vlaneseq
    %v230 = vshrl.u32 %v229, 7
    %v231 = vsub.s32 0, %v230
    %v232 = vrot.slane %v227, %v231
    %v233 = vlaneseq
    %v234 = vshrl.u32 %v233, 7
    %v235 = vsub.s32 1, %v234
    %v236 = vrot.slane %v227, %v235
    %v271 = vunpack.c.l.b16 %v195
    %v272 = vunpack.c.h.b16 %v195
    %v273 = vunpack.c.l.b16 %v196
    %v274 = vunpack.c.h.b16 %v196
    %v275 = vunpack.c.l.b16 %v197
    %v276 = vunpack.c.h.b16 %v197
    %v277 = vunpack.c.l.b16 %v198
    %v278 = vunpack.c.h.b16 %v198
    %v279 = vunpack.c.l.b16 %v199
    %v280 = vunpack.c.h.b16 %v199
    %v281 = vunpack.c.l.b16 %v200
    %v282 = vunpack.c.h.b16 %v200
    %v283 = vunpack.c.l.b16 %v201
    %v284 = vunpack.c.h.b16 %v201
    %v285 = vunpack.c.l.b16 %v202
    %v286 = vunpack.c.h.b16 %v202
    %v287 = vunpack.c.l.b16 %v203
    %v288 = vunpack.c.h.b16 %v203
    %v289 = vunpack.c.l.b16 %v204
    %v290 = vunpack.c.h.b16 %v204
    %v291 = vunpack.c.l.b16 %v205
    %v292 = vunpack.c.h.b16 %v205
    %v293 = vunpack.c.l.b16 %v206
    %v294 = vunpack.c.h.b16 %v206
    %v295 = vunpack.c.l.b16 %v207
    %v296 = vunpack.c.h.b16 %v207
    %v297 = vunpack.c.l.b16 %v208
    %v298 = vunpack.c.h.b16 %v208
    %v299 = vunpack.c.l.b16 %v209
    %v300 = vunpack.c.h.b16 %v209
    %v301 = vunpack.c.l.b16 %v210
    %v302 = vunpack.c.h.b16 %v210
    %v303 = vunpack.c.l.b16 %v211
    %v304 = vunpack.c.h.b16 %v211
    %v305 = vunpack.c.l.b16 %v212
    %v306 = vunpack.c.h.b16 %v212
    %v307 = vunpack.c.l.b16 %v213
    %v308 = vunpack.c.h.b16 %v213
    %v309 = vunpack.c.l.b16 %v214
    %v310 = vunpack.c.h.b16 %v214
    %v311 = vunpack.c.l.b16 %v215
    %v312 = vunpack.c.h.b16 %v215
    %v313 = vunpack.c.l.b16 %v216
    %v314 = vunpack.c.h.b16 %v216
    %v315 = vunpack.c.l.b16 %v217
    %v316 = vunpack.c.h.b16 %v217
    %v317 = vunpack.c.l.b16 %v218
    %v318 = vunpack.c.h.b16 %v218
    %v319 = vunpack.c.l.b16 %v219
    %v320 = vunpack.c.h.b16 %v219
    %v321 = vunpack.c.l.b16 %v220
    %v322 = vunpack.c.h.b16 %v220
    %v323 = vunpack.c.l.b16 %v221
    %v324 = vunpack.c.h.b16 %v221
    %v325 = vunpack.c.l.b16 %v222
    %v326 = vunpack.c.h.b16 %v222
    %v327 = vunpack.c.l.b16 %v223
    %v328 = vunpack.c.h.b16 %v223
    %v329 = vunpack.c.l.b16 %v224
    %v330 = vunpack.c.h.b16 %v224
    %v331 = vunpack.c.l.b16 %v225
    %v332 = vunpack.c.h.b16 %v225
    %v333 = vunpack.c.l.b16 %v226
    %v334 = vunpack.c.h.b16 %v226
    %v335 = vpack.c.b16 %v273, %v271
    %v336 = vpack.c.b16 %v274, %v272
    %v337 = vpack.c.b16 %v277, %v275
    %v338 = vpack.c.b16 %v278, %v276
    %v339 = vpack.c.b16 %v281, %v279
    %v340 = vpack.c.b16 %v282, %v280
    %v341 = vpack.c.b16 %v285, %v283
    %v342 = vpack.c.b16 %v286, %v284
    %v343 = vpack.c.b16 %v289, %v287
    %v344 = vpack.c.b16 %v290, %v288
    %v345 = vpack.c.b16 %v293, %v291
    %v346 = vpack.c.b16 %v294, %v292
    %v347 = vpack.c.b16 %v297, %v295
    %v348 = vpack.c.b16 %v298, %v296
    %v349 = vpack.c.b16 %v301, %v299
    %v350 = vpack.c.b16 %v302, %v300
    %v351 = vpack.c.b16 %v305, %v303
    %v352 = vpack.c.b16 %v306, %v304
    %v353 = vpack.c.b16 %v309, %v307
    %v354 = vpack.c.b16 %v310, %v308
    %v355 = vpack.c.b16 %v313, %v311
    %v356 = vpack.c.b16 %v314, %v312
    %v357 = vpack.c.b16 %v317, %v315
    %v358 = vpack.c.b16 %v318, %v316
    %v359 = vpack.c.b16 %v321, %v319
    %v360 = vpack.c.b16 %v322, %v320
    %v361 = vpack.c.b16 %v325, %v323
    %v362 = vpack.c.b16 %v326, %v324
    %v363 = vpack.c.b16 %v329, %v327
    %v364 = vpack.c.b16 %v330, %v328
    %v365 = vpack.c.b16 %v333, %v331
    %v366 = vpack.c.b16 %v334, %v332
    %399 = vmatprep.subr.bf16.mxu0 %v336
    %400 = vmatpush1.bf16.msra.mxu0 %v335
    %401 = vmatprep.subr.bf16.mxu0 %v338
    %402 = vmatpush1.bf16.msra.mxu0 %v337
    %403 = vmatprep.subr.bf16.mxu0 %v340
    %404 = vmatpush1.bf16.msra.mxu0 %v339
    %405 = vmatprep.subr.bf16.mxu0 %v342
    %406 = vmatpush1.bf16.msra.mxu0 %v341
    %407 = vmatprep.subr.bf16.mxu0 %v344
    %408 = vmatpush1.bf16.msra.mxu0 %v343
    %409 = vmatprep.subr.bf16.mxu0 %v346
    %410 = vmatpush1.bf16.msra.mxu0 %v345
    %411 = vmatprep.subr.bf16.mxu0 %v348
    %412 = vmatpush1.bf16.msra.mxu0 %v347
    %413 = vmatprep.subr.bf16.mxu0 %v350
    %414 = vmatpush1.bf16.msra.mxu0 %v349
    %415 = vmatprep.subr.bf16.mxu0 %v352
    %416 = vmatpush1.bf16.msra.mxu0 %v351
    %417 = vmatprep.subr.bf16.mxu0 %v354
    %418 = vmatpush1.bf16.msra.mxu0 %v353
    %419 = vmatprep.subr.bf16.mxu0 %v356
    %420 = vmatpush1.bf16.msra.mxu0 %v355
    %421 = vmatprep.subr.bf16.mxu0 %v358
    %422 = vmatpush1.bf16.msra.mxu0 %v357
    %423 = vmatprep.subr.bf16.mxu0 %v360
    %424 = vmatpush1.bf16.msra.mxu0 %v359
    %425 = vmatprep.subr.bf16.mxu0 %v362
    %426 = vmatpush1.bf16.msra.mxu0 %v361
    %427 = vmatprep.subr.bf16.mxu0 %v364
    %428 = vmatpush1.bf16.msra.mxu0 %v363
    %429 = vmatprep.subr.bf16.mxu0 %v366
    %430 = vmatpush1.bf16.msra.mxu0 %v365
    %431 = vmatprep.mubr.bf16.mxu0 %v194
    %432 = vmatmul.mubr.bf16.gmra.mrb[0].mxu0 %v193
    %v433 = vpop.f32.mrb[0].mxu0
    %v434 = vadd.f32 %v232, %v433
    %v435 = vpop.f32.mrb[0].mxu0
    %v436 = vadd.f32 %v236, %v435
    %v437 = vpop.f32.mrb[0].mxu0
    %v438 = vadd.f32 %v232, %v437
    %v439 = vpop.f32.mrb[0].mxu0
    %v440 = vadd.f32 %v236, %v439
    %441 = vdwg.mxu0
    %v442 = vmax.f32 %v434, 0.0
    %v443 = vmax.f32 %v436, 0.0
    %v444 = vmax.f32 %v438, 0.0
    %v445 = vmax.f32 %v440, 0.0
    %v446 = vpack.c.bf16 %v444, %v442
    %v447 = vpack.c.bf16 %v445, %v443
    %v448 = vld [vmem:[#allocation4] sm:$0xff]
    %v449 = vld [vmem:[#allocation4 + $0x8] sm:$0xff]
    %v450 = vld [vmem:[#allocation4 + $0x10] sm:$0xff]
    %v451 = vld [vmem:[#allocation4 + $0x18] sm:$0xff]
    %v452 = vld [vmem:[#allocation4 + $0x20] sm:$0xff]
    %v453 = vld [vmem:[#allocation4 + $0x28] sm:$0xff]
    %v454 = vld [vmem:[#allocation4 + $0x30] sm:$0xff]
    %v455 = vld [vmem:[#allocation4 + $0x38] sm:$0xff]
    %v456 = vld [vmem:[#allocation4 + $0x40] sm:$0xff]
    %v457 = vld [vmem:[#allocation4 + $0x48] sm:$0xff]
    %v458 = vld [vmem:[#allocation4 + $0x50] sm:$0xff]
    %v459 = vld [vmem:[#allocation4 + $0x58] sm:$0xff]
    %v460 = vld [vmem:[#allocation4 + $0x60] sm:$0xff]
    %v461 = vld [vmem:[#allocation4 + $0x68] sm:$0xff]
    %v462 = vld [vmem:[#allocation4 + $0x70] sm:$0xff]
    %v463 = vld [vmem:[#allocation4 + $0x78] sm:$0xff]
    %v464 = vld [vmem:[#allocation4 + $0x80] sm:$0xff]
    %v465 = vld [vmem:[#allocation4 + $0x88] sm:$0xff]
    %v466 = vld [vmem:[#allocation4 + $0x90] sm:$0xff]
    %v467 = vld [vmem:[#allocation4 + $0x98] sm:$0xff]
    %v468 = vld [vmem:[#allocation4 + $0xa0] sm:$0xff]
    %v469 = vld [vmem:[#allocation4 + $0xa8] sm:$0xff]
    %v470 = vld [vmem:[#allocation4 + $0xb0] sm:$0xff]
    %v471 = vld [vmem:[#allocation4 + $0xb8] sm:$0xff]
    %v472 = vld [vmem:[#allocation4 + $0xc0] sm:$0xff]
    %v473 = vld [vmem:[#allocation4 + $0xc8] sm:$0xff]
    %v474 = vld [vmem:[#allocation4 + $0xd0] sm:$0xff]
    %v475 = vld [vmem:[#allocation4 + $0xd8] sm:$0xff]
    %v476 = vld [vmem:[#allocation4 + $0xe0] sm:$0xff]
    %v477 = vld [vmem:[#allocation4 + $0xe8] sm:$0xff]
    %v478 = vld [vmem:[#allocation4 + $0xf0] sm:$0xff]
    %v479 = vld [vmem:[#allocation4 + $0xf8] sm:$0xff]
    %v480 = vld [vmem:[%s6] sm:$0x3]
    %v482 = vlaneseq
    %v483 = vshrl.u32 %v482, 7
    %v484 = vsub.s32 0, %v483
    %v485 = vrot.slane %v480, %v484
    %v486 = vlaneseq
    %v487 = vshrl.u32 %v486, 7
    %v488 = vsub.s32 1, %v487
    %v489 = vrot.slane %v480, %v488
    %v524 = vunpack.c.l.b16 %v448
    %v525 = vunpack.c.h.b16 %v448
    %v526 = vunpack.c.l.b16 %v449
    %v527 = vunpack.c.h.b16 %v449
    %v528 = vunpack.c.l.b16 %v450
    %v529 = vunpack.c.h.b16 %v450
    %v530 = vunpack.c.l.b16 %v451
    %v531 = vunpack.c.h.b16 %v451
    %v532 = vunpack.c.l.b16 %v452
    %v533 = vunpack.c.h.b16 %v452
    %v534 = vunpack.c.l.b16 %v453
    %v535 = vunpack.c.h.b16 %v453
    %v536 = vunpack.c.l.b16 %v454
    %v537 = vunpack.c.h.b16 %v454
    %v538 = vunpack.c.l.b16 %v455
    %v539 = vunpack.c.h.b16 %v455
    %v540 = vunpack.c.l.b16 %v456
    %v541 = vunpack.c.h.b16 %v456
    %v542 = vunpack.c.l.b16 %v457
    %v543 = vunpack.c.h.b16 %v457
    %v544 = vunpack.c.l.b16 %v458
    %v545 = vunpack.c.h.b16 %v458
    %v546 = vunpack.c.l.b16 %v459
    %v547 = vunpack.c.h.b16 %v459
    %v548 = vunpack.c.l.b16 %v460
    %v549 = vunpack.c.h.b16 %v460
    %v550 = vunpack.c.l.b16 %v461
    %v551 = vunpack.c.h.b16 %v461
    %v552 = vunpack.c.l.b16 %v462
    %v553 = vunpack.c.h.b16 %v462
    %v554 = vunpack.c.l.b16 %v463
    %v555 = vunpack.c.h.b16 %v463
    %v556 = vunpack.c.l.b16 %v464
    %v557 = vunpack.c.h.b16 %v464
    %v558 = vunpack.c.l.b16 %v465
    %v559 = vunpack.c.h.b16 %v465
    %v560 = vunpack.c.l.b16 %v466
    %v561 = vunpack.c.h.b16 %v466
    %v562 = vunpack.c.l.b16 %v467
    %v563 = vunpack.c.h.b16 %v467
    %v564 = vunpack.c.l.b16 %v468
    %v565 = vunpack.c.h.b16 %v468
    %v566 = vunpack.c.l.b16 %v469
    %v567 = vunpack.c.h.b16 %v469
    %v568 = vunpack.c.l.b16 %v470
    %v569 = vunpack.c.h.b16 %v470
    %v570 = vunpack.c.l.b16 %v471
    %v571 = vunpack.c.h.b16 %v471
    %v572 = vunpack.c.l.b16 %v472
    %v573 = vunpack.c.h.b16 %v472
    %v574 = vunpack.c.l.b16 %v473
    %v575 = vunpack.c.h.b16 %v473
    %v576 = vunpack.c.l.b16 %v474
    %v577 = vunpack.c.h.b16 %v474
    %v578 = vunpack.c.l.b16 %v475
    %v579 = vunpack.c.h.b16 %v475
    %v580 = vunpack.c.l.b16 %v476
    %v581 = vunpack.c.h.b16 %v476
    %v582 = vunpack.c.l.b16 %v477
    %v583 = vunpack.c.h.b16 %v477
    %v584 = vunpack.c.l.b16 %v478
    %v585 = vunpack.c.h.b16 %v478
    %v586 = vunpack.c.l.b16 %v479
    %v587 = vunpack.c.h.b16 %v479
    %v588 = vpack.c.b16 %v526, %v524
    %v589 = vpack.c.b16 %v527, %v525
    %v590 = vpack.c.b16 %v530, %v528
    %v591 = vpack.c.b16 %v531, %v529
    %v592 = vpack.c.b16 %v534, %v532
    %v593 = vpack.c.b16 %v535, %v533
    %v594 = vpack.c.b16 %v538, %v536
    %v595 = vpack.c.b16 %v539, %v537
    %v596 = vpack.c.b16 %v542, %v540
    %v597 = vpack.c.b16 %v543, %v541
    %v598 = vpack.c.b16 %v546, %v544
    %v599 = vpack.c.b16 %v547, %v545
    %v600 = vpack.c.b16 %v550, %v548
    %v601 = vpack.c.b16 %v551, %v549
    %v602 = vpack.c.b16 %v554, %v552
    %v603 = vpack.c.b16 %v555, %v553
    %v604 = vpack.c.b16 %v558, %v556
    %v605 = vpack.c.b16 %v559, %v557
    %v606 = vpack.c.b16 %v562, %v560
    %v607 = vpack.c.b16 %v563, %v561
    %v608 = vpack.c.b16 %v566, %v564
    %v609 = vpack.c.b16 %v567, %v565
    %v610 = vpack.c.b16 %v570, %v568
    %v611 = vpack.c.b16 %v571, %v569
    %v612 = vpack.c.b16 %v574, %v572
    %v613 = vpack.c.b16 %v575, %v573
    %v614 = vpack.c.b16 %v578, %v576
    %v615 = vpack.c.b16 %v579, %v577
    %v616 = vpack.c.b16 %v582, %v580
    %v617 = vpack.c.b16 %v583, %v581
    %v618 = vpack.c.b16 %v586, %v584
    %v619 = vpack.c.b16 %v587, %v585
    %652 = vmatprep.subr.bf16.mxu0 %v589
    %653 = vmatpush1.bf16.msra.mxu0 %v588
    %654 = vmatprep.subr.bf16.mxu0 %v591
    %655 = vmatpush1.bf16.msra.mxu0 %v590
    %656 = vmatprep.subr.bf16.mxu0 %v593
    %657 = vmatpush1.bf16.msra.mxu0 %v592
    %658 = vmatprep.subr.bf16.mxu0 %v595
    %659 = vmatpush1.bf16.msra.mxu0 %v594
    %660 = vmatprep.subr.bf16.mxu0 %v597
    %661 = vmatpush1.bf16.msra.mxu0 %v596
    %662 = vmatprep.subr.bf16.mxu0 %v599
    %663 = vmatpush1.bf16.msra.mxu0 %v598
    %664 = vmatprep.subr.bf16.mxu0 %v601
    %665 = vmatpush1.bf16.msra.mxu0 %v600
    %666 = vmatprep.subr.bf16.mxu0 %v603
    %667 = vmatpush1.bf16.msra.mxu0 %v602
    %668 = vmatprep.subr.bf16.mxu0 %v605
    %669 = vmatpush1.bf16.msra.mxu0 %v604
    %670 = vmatprep.subr.bf16.mxu0 %v607
    %671 = vmatpush1.bf16.msra.mxu0 %v606
    %672 = vmatprep.subr.bf16.mxu0 %v609
    %673 = vmatpush1.bf16.msra.mxu0 %v608
    %674 = vmatprep.subr.bf16.mxu0 %v611
    %675 = vmatpush1.bf16.msra.mxu0 %v610
    %676 = vmatprep.subr.bf16.mxu0 %v613
    %677 = vmatpush1.bf16.msra.mxu0 %v612
    %678 = vmatprep.subr.bf16.mxu0 %v615
    %679 = vmatpush1.bf16.msra.mxu0 %v614
    %680 = vmatprep.subr.bf16.mxu0 %v617
    %681 = vmatpush1.bf16.msra.mxu0 %v616
    %682 = vmatprep.subr.bf16.mxu0 %v619
    %683 = vmatpush1.bf16.msra.mxu0 %v618
    %684 = vmatprep.mubr.bf16.mxu0 %v447
    %685 = vmatmul.mubr.bf16.gmra.mrb[0].mxu0 %v446
    %v686 = vpop.f32.mrb[0].mxu0
    %v687 = vadd.f32 %v485, %v686
    %v688 = vpop.f32.mrb[0].mxu0
    %v689 = vadd.f32 %v489, %v688
    %v690 = vpop.f32.mrb[0].mxu0
    %v691 = vadd.f32 %v485, %v690
    %v692 = vpop.f32.mrb[0].mxu0
    %v693 = vadd.f32 %v489, %v692
    %694 = vdwg.mxu0
    %v695 = vmax.f32 %v687, 0.0
    %v696 = vmax.f32 %v689, 0.0
    %v697 = vmax.f32 %v691, 0.0
    %v698 = vmax.f32 %v693, 0.0
    %v699 = vpack.c.bf16 %v697, %v695
    %v700 = vpack.c.bf16 %v698, %v696
    %v701 = vld [vmem:[#allocation6] sm:$0xff]
    %v702 = vld [vmem:[#allocation6 + $0x8] sm:$0xff]
    %v703 = vld [vmem:[#allocation6 + $0x10] sm:$0xff]
    %v704 = vld [vmem:[#allocation6 + $0x18] sm:$0xff]
    %v705 = vld [vmem:[#allocation6 + $0x20] sm:$0xff]
    %v706 = vld [vmem:[#allocation6 + $0x28] sm:$0xff]
    %v707 = vld [vmem:[#allocation6 + $0x30] sm:$0xff]
    %v708 = vld [vmem:[#allocation6 + $0x38] sm:$0xff]
    %v709 = vld [vmem:[#allocation6 + $0x40] sm:$0xff]
    %v710 = vld [vmem:[#allocation6 + $0x48] sm:$0xff]
    %v711 = vld [vmem:[#allocation6 + $0x50] sm:$0xff]
    %v712 = vld [vmem:[#allocation6 + $0x58] sm:$0xff]
    %v713 = vld [vmem:[#allocation6 + $0x60] sm:$0xff]
    %v714 = vld [vmem:[#allocation6 + $0x68] sm:$0xff]
    %v715 = vld [vmem:[#allocation6 + $0x70] sm:$0xff]
    %v716 = vld [vmem:[#allocation6 + $0x78] sm:$0xff]
    %v717 = vld [vmem:[#allocation6 + $0x80] sm:$0xff]
    %v718 = vld [vmem:[#allocation6 + $0x88] sm:$0xff]
    %v719 = vld [vmem:[#allocation6 + $0x90] sm:$0xff]
    %v720 = vld [vmem:[#allocation6 + $0x98] sm:$0xff]
    %v721 = vld [vmem:[#allocation6 + $0xa0] sm:$0xff]
    %v722 = vld [vmem:[#allocation6 + $0xa8] sm:$0xff]
    %v723 = vld [vmem:[#allocation6 + $0xb0] sm:$0xff]
    %v724 = vld [vmem:[#allocation6 + $0xb8] sm:$0xff]
    %v725 = vld [vmem:[#allocation6 + $0xc0] sm:$0xff]
    %v726 = vld [vmem:[#allocation6 + $0xc8] sm:$0xff]
    %v727 = vld [vmem:[#allocation6 + $0xd0] sm:$0xff]
    %v728 = vld [vmem:[#allocation6 + $0xd8] sm:$0xff]
    %v729 = vld [vmem:[#allocation6 + $0xe0] sm:$0xff]
    %v730 = vld [vmem:[#allocation6 + $0xe8] sm:$0xff]
    %v731 = vld [vmem:[#allocation6 + $0xf0] sm:$0xff]
    %v732 = vld [vmem:[#allocation6 + $0xf8] sm:$0xff]
    %v733 = vld [vmem:[%s8] sm:$0x3]
    %v735 = vlaneseq
    %v736 = vshrl.u32 %v735, 7
    %v737 = vsub.s32 0, %v736
    %v738 = vrot.slane %v733, %v737
    %v739 = vlaneseq
    %v740 = vshrl.u32 %v739, 7
    %v741 = vsub.s32 1, %v740
    %v742 = vrot.slane %v733, %v741
    %v777 = vunpack.c.l.b16 %v701
    %v778 = vunpack.c.h.b16 %v701
    %v779 = vunpack.c.l.b16 %v702
    %v780 = vunpack.c.h.b16 %v702
    %v781 = vunpack.c.l.b16 %v703
    %v782 = vunpack.c.h.b16 %v703
    %v783 = vunpack.c.l.b16 %v704
    %v784 = vunpack.c.h.b16 %v704
    %v785 = vunpack.c.l.b16 %v705
    %v786 = vunpack.c.h.b16 %v705
    %v787 = vunpack.c.l.b16 %v706
    %v788 = vunpack.c.h.b16 %v706
    %v789 = vunpack.c.l.b16 %v707
    %v790 = vunpack.c.h.b16 %v707
    %v791 = vunpack.c.l.b16 %v708
    %v792 = vunpack.c.h.b16 %v708
    %v793 = vunpack.c.l.b16 %v709
    %v794 = vunpack.c.h.b16 %v709
    %v795 = vunpack.c.l.b16 %v710
    %v796 = vunpack.c.h.b16 %v710
    %v797 = vunpack.c.l.b16 %v711
    %v798 = vunpack.c.h.b16 %v711
    %v799 = vunpack.c.l.b16 %v712
    %v800 = vunpack.c.h.b16 %v712
    %v801 = vunpack.c.l.b16 %v713
    %v802 = vunpack.c.h.b16 %v713
    %v803 = vunpack.c.l.b16 %v714
    %v804 = vunpack.c.h.b16 %v714
    %v805 = vunpack.c.l.b16 %v715
    %v806 = vunpack.c.h.b16 %v715
    %v807 = vunpack.c.l.b16 %v716
    %v808 = vunpack.c.h.b16 %v716
    %v809 = vunpack.c.l.b16 %v717
    %v810 = vunpack.c.h.b16 %v717
    %v811 = vunpack.c.l.b16 %v718
    %v812 = vunpack.c.h.b16 %v718
    %v813 = vunpack.c.l.b16 %v719
    %v814 = vunpack.c.h.b16 %v719
    %v815 = vunpack.c.l.b16 %v720
    %v816 = vunpack.c.h.b16 %v720
    %v817 = vunpack.c.l.b16 %v721
    %v818 = vunpack.c.h.b16 %v721
    %v819 = vunpack.c.l.b16 %v722
    %v820 = vunpack.c.h.b16 %v722
    %v821 = vunpack.c.l.b16 %v723
    %v822 = vunpack.c.h.b16 %v723
    %v823 = vunpack.c.l.b16 %v724
    %v824 = vunpack.c.h.b16 %v724
    %v825 = vunpack.c.l.b16 %v725
    %v826 = vunpack.c.h.b16 %v725
    %v827 = vunpack.c.l.b16 %v726
    %v828 = vunpack.c.h.b16 %v726
    %v829 = vunpack.c.l.b16 %v727
    %v830 = vunpack.c.h.b16 %v727
    %v831 = vunpack.c.l.b16 %v728
    %v832 = vunpack.c.h.b16 %v728
    %v833 = vunpack.c.l.b16 %v729
    %v834 = vunpack.c.h.b16 %v729
    %v835 = vunpack.c.l.b16 %v730
    %v836 = vunpack.c.h.b16 %v730
    %v837 = vunpack.c.l.b16 %v731
    %v838 = vunpack.c.h.b16 %v731
    %v839 = vunpack.c.l.b16 %v732
    %v840 = vunpack.c.h.b16 %v732
    %v841 = vpack.c.b16 %v779, %v777
    %v842 = vpack.c.b16 %v780, %v778
    %v843 = vpack.c.b16 %v783, %v781
    %v844 = vpack.c.b16 %v784, %v782
    %v845 = vpack.c.b16 %v787, %v785
    %v846 = vpack.c.b16 %v788, %v786
    %v847 = vpack.c.b16 %v791, %v789
    %v848 = vpack.c.b16 %v792, %v790
    %v849 = vpack.c.b16 %v795, %v793
    %v850 = vpack.c.b16 %v796, %v794
    %v851 = vpack.c.b16 %v799, %v797
    %v852 = vpack.c.b16 %v800, %v798
    %v853 = vpack.c.b16 %v803, %v801
    %v854 = vpack.c.b16 %v804, %v802
    %v855 = vpack.c.b16 %v807, %v805
    %v856 = vpack.c.b16 %v808, %v806
    %v857 = vpack.c.b16 %v811, %v809
    %v858 = vpack.c.b16 %v812, %v810
    %v859 = vpack.c.b16 %v815, %v813
    %v860 = vpack.c.b16 %v816, %v814
    %v861 = vpack.c.b16 %v819, %v817
    %v862 = vpack.c.b16 %v820, %v818
    %v863 = vpack.c.b16 %v823, %v821
    %v864 = vpack.c.b16 %v824, %v822
    %v865 = vpack.c.b16 %v827, %v825
    %v866 = vpack.c.b16 %v828, %v826
    %v867 = vpack.c.b16 %v831, %v829
    %v868 = vpack.c.b16 %v832, %v830
    %v869 = vpack.c.b16 %v835, %v833
    %v870 = vpack.c.b16 %v836, %v834
    %v871 = vpack.c.b16 %v839, %v837
    %v872 = vpack.c.b16 %v840, %v838
    %905 = vmatprep.subr.bf16.mxu0 %v842
    %906 = vmatpush1.bf16.msra.mxu0 %v841
    %907 = vmatprep.subr.bf16.mxu0 %v844
    %908 = vmatpush1.bf16.msra.mxu0 %v843
    %909 = vmatprep.subr.bf16.mxu0 %v846
    %910 = vmatpush1.bf16.msra.mxu0 %v845
    %911 = vmatprep.subr.bf16.mxu0 %v848
    %912 = vmatpush1.bf16.msra.mxu0 %v847
    %913 = vmatprep.subr.bf16.mxu0 %v850
    %914 = vmatpush1.bf16.msra.mxu0 %v849
    %915 = vmatprep.subr.bf16.mxu0 %v852
    %916 = vmatpush1.bf16.msra.mxu0 %v851
    %917 = vmatprep.subr.bf16.mxu0 %v854
    %918 = vmatpush1.bf16.msra.mxu0 %v853
    %919 = vmatprep.subr.bf16.mxu0 %v856
    %920 = vmatpush1.bf16.msra.mxu0 %v855
    %921 = vmatprep.subr.bf16.mxu0 %v858
    %922 = vmatpush1.bf16.msra.mxu0 %v857
    %923 = vmatprep.subr.bf16.mxu0 %v860
    %924 = vmatpush1.bf16.msra.mxu0 %v859
    %925 = vmatprep.subr.bf16.mxu0 %v862
    %926 = vmatpush1.bf16.msra.mxu0 %v861
    %927 = vmatprep.subr.bf16.mxu0 %v864
    %928 = vmatpush1.bf16.msra.mxu0 %v863
    %929 = vmatprep.subr.bf16.mxu0 %v866
    %930 = vmatpush1.bf16.msra.mxu0 %v865
    %931 = vmatprep.subr.bf16.mxu0 %v868
    %932 = vmatpush1.bf16.msra.mxu0 %v867
    %933 = vmatprep.subr.bf16.mxu0 %v870
    %934 = vmatpush1.bf16.msra.mxu0 %v869
    %935 = vmatprep.subr.bf16.mxu0 %v872
    %936 = vmatpush1.bf16.msra.mxu0 %v871
    %937 = vmatprep.mubr.bf16.mxu0 %v700
    %938 = vmatmul.mubr.bf16.gmra.mrb[0].mxu0 %v699
    %v939 = vpop.f32.mrb[0].mxu0
    %v940 = vadd.f32 %v738, %v939
    %v941 = vpop.f32.mrb[0].mxu0
    %v942 = vadd.f32 %v742, %v941
    %v943 = vpop.f32.mrb[0].mxu0
    %v944 = vadd.f32 %v738, %v943
    %v945 = vpop.f32.mrb[0].mxu0
    %v946 = vadd.f32 %v742, %v945
    %947 = vdwg.mxu0
    %v948 = vmax.f32 %v940, 0.0
    %v949 = vmax.f32 %v942, 0.0
    %v950 = vmax.f32 %v944, 0.0
    %v951 = vmax.f32 %v946, 0.0
    %v952 = vpack.c.bf16 %v950, %v948
    %v953 = vpack.c.bf16 %v951, %v949
    %v954 = vld [vmem:[%s9] sm:$0xf]
    %v955 = vld [vmem:[%s9 + $0x4] sm:$0xf]
    %v956 = vld [vmem:[%s9 + $0x8] sm:$0xf]
    %v957 = vld [vmem:[%s9 + $0xc] sm:$0xf]
    %v958 = vld [vmem:[%s9 + $0x10] sm:$0xf]
    %v959 = vld [vmem:[%s9 + $0x14] sm:$0xf]
    %v960 = vld [vmem:[%s9 + $0x18] sm:$0xf]
    %v961 = vld [vmem:[%s9 + $0x1c] sm:$0xf]
    %v962 = vld [vmem:[%s9 + $0x20] sm:$0xf]
    %v963 = vld [vmem:[%s9 + $0x24] sm:$0xf]
    %v964 = vld [vmem:[%s9 + $0x28] sm:$0xf]
    %v965 = vld [vmem:[%s9 + $0x2c] sm:$0xf]
    %v966 = vld [vmem:[%s9 + $0x30] sm:$0xf]
    %v967 = vld [vmem:[%s9 + $0x34] sm:$0xf]
    %v968 = vld [vmem:[%s9 + $0x38] sm:$0xf]
    %v969 = vld [vmem:[%s9 + $0x3c] sm:$0xf]
    %v970 = vld [vmem:[%s9 + $0x40] sm:$0xf]
    %v971 = vld [vmem:[%s9 + $0x44] sm:$0xf]
    %v972 = vld [vmem:[%s9 + $0x48] sm:$0xf]
    %v973 = vld [vmem:[%s9 + $0x4c] sm:$0xf]
    %v974 = vld [vmem:[%s9 + $0x50] sm:$0xf]
    %v975 = vld [vmem:[%s9 + $0x54] sm:$0xf]
    %v976 = vld [vmem:[%s9 + $0x58] sm:$0xf]
    %v977 = vld [vmem:[%s9 + $0x5c] sm:$0xf]
    %v978 = vld [vmem:[%s9 + $0x60] sm:$0xf]
    %v979 = vld [vmem:[%s9 + $0x64] sm:$0xf]
    %v980 = vld [vmem:[%s9 + $0x68] sm:$0xf]
    %v981 = vld [vmem:[%s9 + $0x6c] sm:$0xf]
    %v982 = vld [vmem:[%s9 + $0x70] sm:$0xf]
    %v983 = vld [vmem:[%s9 + $0x74] sm:$0xf]
    %v984 = vld [vmem:[%s9 + $0x78] sm:$0xf]
    %v985 = vld [vmem:[%s9 + $0x7c] sm:$0xf]
    %v986 = vld [vmem:[%s10] sm:$0x1]
    %v988 = vlaneseq
    %v989 = vshrl.u32 %v988, 7
    %v990 = vsub.s32 0, %v989
    %v991 = vrot.slane %v986, %v990
    %v1025 = vunpack.c.l.b16 %v954
    %v1026 = vunpack.c.l.b16 %v955
    %v1027 = vunpack.c.l.b16 %v956
    %v1028 = vunpack.c.l.b16 %v957
    %v1029 = vunpack.c.l.b16 %v958
    %v1030 = vunpack.c.l.b16 %v959
    %v1031 = vunpack.c.l.b16 %v960
    %v1032 = vunpack.c.l.b16 %v961
    %v1033 = vunpack.c.l.b16 %v962
    %v1034 = vunpack.c.l.b16 %v963
    %v1035 = vunpack.c.l.b16 %v964
    %v1036 = vunpack.c.l.b16 %v965
    %v1037 = vunpack.c.l.b16 %v966
    %v1038 = vunpack.c.l.b16 %v967
    %v1039 = vunpack.c.l.b16 %v968
    %v1040 = vunpack.c.l.b16 %v969
    %v1041 = vunpack.c.l.b16 %v970
    %v1042 = vunpack.c.l.b16 %v971
    %v1043 = vunpack.c.l.b16 %v972
    %v1044 = vunpack.c.l.b16 %v973
    %v1045 = vunpack.c.l.b16 %v974
    %v1046 = vunpack.c.l.b16 %v975
    %v1047 = vunpack.c.l.b16 %v976
    %v1048 = vunpack.c.l.b16 %v977
    %v1049 = vunpack.c.l.b16 %v978
    %v1050 = vunpack.c.l.b16 %v979
    %v1051 = vunpack.c.l.b16 %v980
    %v1052 = vunpack.c.l.b16 %v981
    %v1053 = vunpack.c.l.b16 %v982
    %v1054 = vunpack.c.l.b16 %v983
    %v1055 = vunpack.c.l.b16 %v984
    %v1056 = vunpack.c.l.b16 %v985
    %v1057 = vpack.c.b16 %v1026, %v1025
    %v1058 = vpack.c.b16 %v1028, %v1027
    %v1059 = vpack.c.b16 %v1030, %v1029
    %v1060 = vpack.c.b16 %v1032, %v1031
    %v1061 = vpack.c.b16 %v1034, %v1033
    %v1062 = vpack.c.b16 %v1036, %v1035
    %v1063 = vpack.c.b16 %v1038, %v1037
    %v1064 = vpack.c.b16 %v1040, %v1039
    %v1065 = vpack.c.b16 %v1042, %v1041
    %v1066 = vpack.c.b16 %v1044, %v1043
    %v1067 = vpack.c.b16 %v1046, %v1045
    %v1068 = vpack.c.b16 %v1048, %v1047
    %v1069 = vpack.c.b16 %v1050, %v1049
    %v1070 = vpack.c.b16 %v1052, %v1051
    %v1071 = vpack.c.b16 %v1054, %v1053
    %v1072 = vpack.c.b16 %v1056, %v1055
    %1089 = vmatprep.subr.bf16.mxu0 0
    %1090 = vmatpush1.bf16.msra.mxu0 %v1057
    %1091 = vmatprep.subr.bf16.mxu0 0
    %1092 = vmatpush1.bf16.msra.mxu0 %v1058
    %1093 = vmatprep.subr.bf16.mxu0 0
    %1094 = vmatpush1.bf16.msra.mxu0 %v1059
    %1095 = vmatprep.subr.bf16.mxu0 0
    %1096 = vmatpush1.bf16.msra.mxu0 %v1060
    %1097 = vmatprep.subr.bf16.mxu0 0
    %1098 = vmatpush1.bf16.msra.mxu0 %v1061
    %1099 = vmatprep.subr.bf16.mxu0 0
    %1100 = vmatpush1.bf16.msra.mxu0 %v1062
    %1101 = vmatprep.subr.bf16.mxu0 0
    %1102 = vmatpush1.bf16.msra.mxu0 %v1063
    %1103 = vmatprep.subr.bf16.mxu0 0
    %1104 = vmatpush1.bf16.msra.mxu0 %v1064
    %1105 = vmatprep.subr.bf16.mxu0 0
    %1106 = vmatpush1.bf16.msra.mxu0 %v1065
    %1107 = vmatprep.subr.bf16.mxu0 0
    %1108 = vmatpush1.bf16.msra.mxu0 %v1066
    %1109 = vmatprep.subr.bf16.mxu0 0
    %1110 = vmatpush1.bf16.msra.mxu0 %v1067
    %1111 = vmatprep.subr.bf16.mxu0 0
    %1112 = vmatpush1.bf16.msra.mxu0 %v1068
    %1113 = vmatprep.subr.bf16.mxu0 0
    %1114 = vmatpush1.bf16.msra.mxu0 %v1069
    %1115 = vmatprep.subr.bf16.mxu0 0
    %1116 = vmatpush1.bf16.msra.mxu0 %v1070
    %1117 = vmatprep.subr.bf16.mxu0 0
    %1118 = vmatpush1.bf16.msra.mxu0 %v1071
    %1119 = vmatprep.subr.bf16.mxu0 0
    %1120 = vmatpush1.bf16.msra.mxu0 %v1072
    %1121 = vmatprep.mubr.bf16.mxu0 %v953
    %1122 = vmatmul.mubr.bf16.gmra.mrb[0].mxu0 %v952
    %v1123 = vpop.f32.mrb[0].mxu0
    %v1124 = vadd.f32 %v991, %v1123
    %v1125 = vpop.f32.mrb[0].mxu0
    %v1126 = vpop.f32.mrb[0].mxu0
    %v1127 = vadd.f32 %v991, %v1126
    %v1128 = vpop.f32.mrb[0].mxu0
    %1129 = vdwg.mxu0
    %vm1130 = vcmask 64512
    %1131 = vst.msk [vmem:[%s11] sm:$0xff] %vm1130, %v1124
    %1132 = vst.msk [vmem:[%s11 + $0x8] sm:$0xff] %vm1130, %v1127
    // Predicated region
    $region58: #{forward.1} parent=1 // pred_check
      _
    $region59: #{forward.1} parent=1 // pred_check_branch
      %1134 = sbr.rel (0) target = $region61
    $region60: #{forward.1} parent=1 // pred_region
      _
    $region61: #{forward.1} parent=1 // pred_fallthru
      _
    // Predicated region
    $region62: #{forward.1} parent=1 // pred_check
      _
    $region63: #{forward.1} parent=1 // pred_check_branch
      %1136 = sbr.rel (0) target = $region65
    $region64: #{forward.1} parent=1 // pred_region
      _
    $region65: #{forward.1} parent=1 // pred_fallthru
      _
    %1137 = vsyncpa [#allocation3], 1
    %1138 = vsyncpa [#allocation5], 1

</llo_original>
